<compile_context>
chip_gen: v6e
topology: v6e:2x2x1
jax: 0.10.0
libtpu: 0.0.40
codegen_flags: <defaults>
</compile_context>

<pallas_src>
import functools

import jax
import jax.numpy as jnp
from jax import lax
from jax.experimental import pallas as pl
from jax.experimental.pallas import tpu as pltpu


# --------------------------------- kernel -------------------------------------

def _patch_embed_kernel(idx_ref, x_ref, w_ref, b_ref, table_ref, o_ref,
                        pos_scratch, *, tm):
    """One (tm, H) row tile of flattened patches per grid step.

    idx_ref:     (BN_pad,) int32 SMEM   scalar-prefetched pos-table row ids
    x_ref:       (tm, CPP) bf16         flattened patches (row tile)
    w_ref:       (CPP, H)  bf16         resident projection weight
    b_ref:       (1, H)    f32          projection bias
    table_ref:   (T, H)    f32          resident positional-embedding table
    o_ref:       (tm, H)   f32          patch tokens with pos-emb added
    pos_scratch: (tm, H)   f32          VMEM scratch for gathered pos rows
    """
    # Patch projection: Conv2d(kernel=stride=patch) == flat-patch matmul.
    # bf16 operands on the MXU, f32 accumulation.
    tok = jnp.dot(x_ref[...], w_ref[...], preferred_element_type=jnp.float32)

    # Positional gather: per-row dynamic-slice reads of the resident table,
    # driven by scalar-prefetched indices (replaces the one-hot matmul).
    base = pl.program_id(0) * tm

    def gather_row(r, carry):
        row = idx_ref[base + r]                               # SMEM scalar read
        pos_scratch[pl.ds(r, 1), :] = table_ref[pl.ds(row, 1), :]
        return carry

    lax.fori_loop(0, tm, gather_row, 0)

    # Elementwise adds kept in f32; single lane-dense unmasked store.
    o_ref[...] = (tok + b_ref[...] + pos_scratch[...]).astype(o_ref.dtype)


# ------------------------------ parameter prep ---------------------------------

def init_params(key, hidden, patch_size, num_pos):
    """Torch-layout parameters (as the PyTorch module holds them)."""
    k1, k2, k3, k4 = jax.random.split(key, 4)
    return {
        "conv_w": 0.05 * jax.random.normal(
            k1, (hidden, 3, patch_size, patch_size), jnp.float32),
        "conv_b": 0.01 * jax.random.normal(k2, (hidden,), jnp.float32),
        "cls_token": 0.02 * jax.random.normal(k3, (1, 1, hidden), jnp.float32),
        "pos_table": 0.02 * jax.random.normal(k4, (num_pos, hidden), jnp.float32),
    }


def prepare_params(params):
    """One-time layout/dtype plumbing at parameter load (not per forward)."""
    H, C, P, _ = params["conv_w"].shape
    cpp = C * P * P
    return {
        "proj_w": params["conv_w"].reshape(H, cpp).T.astype(jnp.bfloat16),  # (CPP, H)
        "proj_b": params["conv_b"].reshape(1, H).astype(jnp.float32),
        "cls_token": params["cls_token"].reshape(1, H).astype(jnp.float32),
        "pos_table": params["pos_table"].astype(jnp.float32),               # (T, H)
    }


# -------------------------------- wrapper --------------------------------------

def embeddings_forward(x_patches, pos, prep, *, patch_size, img_dim):
    """x_patches: (B, N, 3, P, P) f32; pos: (B, N, 2) f32 in [0, 1)."""
    B, N, C, P, _ = x_patches.shape
    CPP = C * P * P
    H = prep["proj_w"].shape[1]
    T = prep["pos_table"].shape[0]
    width_pos = img_dim // patch_size

    BN = B * N
    # Row-tile size: fill the MXU M dimension when BN is large; otherwise a
    # single 8-sublane-aligned tile.
    if BN >= 256:
        tm = 256
    elif BN >= 128:
        tm = 128
    else:
        tm = ((BN + 7) // 8) * 8
    n_tiles = (BN + tm - 1) // tm
    BN_pad = n_tiles * tm

    # UvPosEmbedding index math in the wrapper (trivial), clamped to [0, T-1].
    pos2 = pos.reshape(BN, 2).astype(jnp.float32)
    pf = jnp.floor(pos2 * width_pos)
    idx = (pf[:, 0] * width_pos + pf[:, 1] + 1.0).astype(jnp.int32)
    idx = jnp.clip(idx, 0, T - 1)

    # Flatten patches in torch (c, i, j) order; bf16 halves the x DMA bytes.
    x_flat = x_patches.reshape(BN, CPP).astype(jnp.bfloat16)
    if BN_pad != BN:
        x_flat = jnp.pad(x_flat, ((0, BN_pad - BN), (0, 0)))
        idx = jnp.pad(idx, (0, BN_pad - BN))

    kernel = functools.partial(_patch_embed_kernel, tm=tm)
    tokens = pl.pallas_call(
        kernel,
        out_shape=jax.ShapeDtypeStruct((BN_pad, H), jnp.float32),
        grid_spec=pltpu.PrefetchScalarGridSpec(
            num_scalar_prefetch=1,
            grid=(n_tiles,),
            in_specs=[
                pl.BlockSpec((tm, CPP), lambda t, idx_ref: (t, 0)),  # x row tile
                pl.BlockSpec((CPP, H), lambda t, idx_ref: (0, 0)),   # resident W
                pl.BlockSpec((1, H), lambda t, idx_ref: (0, 0)),     # bias
                pl.BlockSpec((T, H), lambda t, idx_ref: (0, 0)),     # pos table
            ],
            out_specs=pl.BlockSpec((tm, H), lambda t, idx_ref: (t, 0)),
            scratch_shapes=[pltpu.VMEM((tm, H), jnp.float32)],
        ),
        compiler_params=pltpu.CompilerParams(
            dimension_semantics=("parallel",),
            vmem_limit_bytes=32 * 1024 * 1024,
        ),
    )(idx, x_flat, prep["proj_w"], prep["proj_b"], prep["pos_table"])

    tokens = tokens[:BN].reshape(B, N, H)

    # Batch-invariant cls row: computed once here, broadcast (not per grid step).
    cls_row = prep["cls_token"] + prep["pos_table"][0:1, :]          # (1, H)
    cls_tok = jnp.broadcast_to(cls_row[None, :, :], (B, 1, H)).astype(tokens.dtype)

    # TODO(synk): dropout == identity (eval); scale-embedding / 3-D input
    #             branches not implemented (module defaults disable them).
    return jnp.concatenate([cls_tok, tokens], axis=1)                # (B, N+1, H)


# ----------------------------- pure-JAX reference -------------------------------

def embeddings_reference(x_patches, pos, params, *, patch_size, img_dim):
    B, N, C, P, _ = x_patches.shape
    H = params["conv_w"].shape[0]
    T = params["pos_table"].shape[0]
    width_pos = img_dim // patch_size

    xf = x_patches.reshape(B * N, C * P * P)
    w = params["conv_w"].reshape(H, -1)                              # (H, CPP)
    tok = xf @ w.T + params["conv_b"][None, :]                       # (B*N, H)

    pf = jnp.floor(pos.reshape(B * N, 2) * width_pos)
    idx = jnp.clip((pf[:, 0] * width_pos + pf[:, 1] + 1.0).astype(jnp.int32), 0, T - 1)
    pos_emb = params["pos_table"][idx]                               # (B*N, H)
    tok = (tok + pos_emb).reshape(B, N, H)

    cls = params["cls_token"].reshape(1, H) + params["pos_table"][0:1]
    cls = jnp.broadcast_to(cls[None, :, :], (B, 1, H))
    return jnp.concatenate([cls, tok], axis=1)                       # (B, N+1, H)


# ----------------------------------- main ---------------------------------------

if __name__ == "__main__":
    # Small config consistent with the module: 3x16x16 patches, hidden=128
    # (multiple of 128 -> lane-dense stores), img_dim=384.
    B, N = 2, 8
    C, patch_size = 3, 16
    hidden = 128
    img_dim = 384
    width_pos = img_dim // patch_size
    num_pos = width_pos * width_pos + 1                              # 577

    key = jax.random.PRNGKey(0)
    kx, kp, kw = jax.random.split(key, 3)
    x = jax.random.normal(kx, (B, N, C, patch_size, patch_size), jnp.float32)
    pos = jax.random.uniform(kp, (B, N, 2), jnp.float32, minval=0.0, maxval=0.999)
    params = init_params(kw, hidden, patch_size, num_pos)
    prep = prepare_params(params)

    out = embeddings_forward(x, pos, prep, patch_size=patch_size, img_dim=img_dim)
    out = jax.block_until_ready(out)
    assert out.shape == (B, N + 1, hidden)

    # Loosened tolerance vs the pure-f32 reference (bf16 MXU operands).
    ref = embeddings_reference(x, pos, params, patch_size=patch_size, img_dim=img_dim)
    assert jnp.allclose(out, ref, atol=5e-2, rtol=5e-2), "mismatch vs f32 reference"

    # Tight check vs a bf16-operand-matched reference: validates the gather,
    # bias, cls row and concat exactly (only the matmul operands are rounded).
    xf_bf = x.reshape(B * N, -1).astype(jnp.bfloat16).astype(jnp.float32)
    w_bf = params["conv_w"].reshape(hidden, -1).T.astype(jnp.bfloat16).astype(jnp.float32)
    tok_bf = xf_bf @ w_bf + params["conv_b"][None, :]
    pf = jnp.floor(pos.reshape(B * N, 2) * width_pos)
    idx = jnp.clip((pf[:, 0] * width_pos + pf[:, 1] + 1.0).astype(jnp.int32), 0, num_pos - 1)
    tok_bf = (tok_bf + params["pos_table"][idx]).reshape(B, N, hidden)
    cls = params["cls_token"].reshape(1, hidden) + params["pos_table"][0:1]
    ref_bf = jnp.concatenate(
        [jnp.broadcast_to(cls[None], (B, 1, hidden)), tok_bf], axis=1)
    assert jnp.allclose(out, ref_bf, atol=5e-3, rtol=5e-3), "mismatch vs bf16-matched ref"

    print("KERNEL_OK")
</pallas_src>

<mosaic_0001>
module attributes {stable_mosaic.version = 11 : i64} {
  func.func @_patch_embed_kernel(%arg0: i32, %arg1: memref<16xi32, #tpu.memory_space<smem>>, %arg2: memref<16x768xbf16, #tpu.memory_space<vmem>>, %arg3: memref<768x128xbf16, #tpu.memory_space<vmem>>, %arg4: memref<1x128xf32, #tpu.memory_space<vmem>>, %arg5: memref<577x128xf32, #tpu.memory_space<vmem>>, %arg6: memref<16x128xf32, #tpu.memory_space<vmem>>, %arg7: memref<16x128xf32, #tpu.memory_space<vmem>>) attributes {dimension_semantics = [#tpu.dimension_semantics<parallel>], iteration_bounds = array<i64: 1>, scalar_prefetch = 1 : i64, scratch_operands = 1 : i64, tpu.core_type = #tpu.core_type<tc>, window_params = [{transform_indices = @transform_0, window_bounds = array<i64: 16, 768>}, {pipeline_mode = #tpu.pipeline_mode<synchronous>, transform_indices = @transform_1, window_bounds = array<i64: 768, 128>}, {pipeline_mode = #tpu.pipeline_mode<synchronous>, transform_indices = @transform_2, window_bounds = array<i64: 1, 128>}, {pipeline_mode = #tpu.pipeline_mode<synchronous>, transform_indices = @transform_3, window_bounds = array<i64: 577, 128>}, {transform_indices = @transform_4, window_bounds = array<i64: 16, 128>}]} {
    %c0 = arith.constant 0 : index
    %c0_0 = arith.constant 0 : index
    %0 = vector.load %arg2[%c0, %c0_0] : memref<16x768xbf16, #tpu.memory_space<vmem>>, vector<16x768xbf16>
    %c0_1 = arith.constant 0 : index
    %c0_2 = arith.constant 0 : index
    %1 = vector.load %arg3[%c0_1, %c0_2] : memref<768x128xbf16, #tpu.memory_space<vmem>>, vector<768x128xbf16>
    %cst = arith.constant dense<0.000000e+00> : vector<16x128xf32>
    %2 = tpu.matmul %0, %1, %cst {dimension_numbers = #tpu.dot_dimension_numbers<[1], [0], [0], [1], [0, 0, 1, 1], [], []>} : vector<16x768xbf16>, vector<768x128xbf16>, vector<16x128xf32> -> vector<16x128xf32>
    %c16_i32 = arith.constant 16 : i32
    %3 = arith.muli %arg0, %c16_i32 : i32
    %c0_i32 = arith.constant 0 : i32
    %c16_i32_3 = arith.constant 16 : i32
    %4 = arith.addi %c0_i32, %c16_i32_3 : i32
    %c1_i32 = arith.constant 1 : i32
    scf.for %arg8 = %c0_i32 to %4 step %c1_i32  : i32 {
      %11 = arith.addi %3, %arg8 : i32
      %12 = arith.index_cast %11 : i32 to index
      %13 = memref.load %arg1[%12] : memref<16xi32, #tpu.memory_space<smem>>
      %14 = arith.index_cast %13 : i32 to index
      %c0_11 = arith.constant 0 : index
      %15 = vector.load %arg5[%14, %c0_11] : memref<577x128xf32, #tpu.memory_space<vmem>>, vector<1x128xf32>
      %16 = arith.index_cast %arg8 : i32 to index
      %c0_12 = arith.constant 0 : index
      %17 = vector.load %arg7[%16, %c0_12] : memref<16x128xf32, #tpu.memory_space<vmem>>, vector<1x128xf32>
      tpu.vector_store %arg7[%16, %c0_12], %15 {strides = array<i32>} : memref<16x128xf32, #tpu.memory_space<vmem>>, vector<1x128xf32>,
    }
    %c16_i32_4 = arith.constant 16 : i32
    %c0_5 = arith.constant 0 : index
    %c0_6 = arith.constant 0 : index
    %5 = vector.load %arg4[%c0_5, %c0_6] : memref<1x128xf32, #tpu.memory_space<vmem>>, vector<1x128xf32>
    %6 = vector.broadcast %5 : vector<1x128xf32> to vector<16x128xf32>
    %7 = arith.addf %2, %6 : vector<16x128xf32>
    %c0_7 = arith.constant 0 : index
    %c0_8 = arith.constant 0 : index
    %8 = vector.load %arg7[%c0_7, %c0_8] : memref<16x128xf32, #tpu.memory_space<vmem>>, vector<16x128xf32>
    %9 = arith.addf %7, %8 : vector<16x128xf32>
    %c0_9 = arith.constant 0 : index
    %c0_10 = arith.constant 0 : index
    %10 = vector.load %arg6[%c0_9, %c0_10] : memref<16x128xf32, #tpu.memory_space<vmem>>, vector<16x128xf32>
    tpu.vector_store %arg6[%c0_9, %c0_10], %9 {strides = array<i32>} : memref<16x128xf32, #tpu.memory_space<vmem>>, vector<16x128xf32>,
    return
  }
  func.func @transform_0(%arg0: i32, %arg1: memref<16xi32, #tpu.memory_space<smem>>) -> (i32, i32) {
    %c0_i32 = arith.constant 0 : i32
    %c0_i32_0 = arith.constant 0 : i32
    return %arg0, %c0_i32 : i32, i32
  }
  func.func @transform_1(%arg0: i32, %arg1: memref<16xi32, #tpu.memory_space<smem>>) -> (i32, i32) {
    %c0_i32 = arith.constant 0 : i32
    %c0_i32_0 = arith.constant 0 : i32
    %c0_i32_1 = arith.constant 0 : i32
    return %c0_i32, %c0_i32_0 : i32, i32
  }
  func.func @transform_2(%arg0: i32, %arg1: memref<16xi32, #tpu.memory_space<smem>>) -> (i32, i32) {
    %c0_i32 = arith.constant 0 : i32
    %c0_i32_0 = arith.constant 0 : i32
    %c0_i32_1 = arith.constant 0 : i32
    return %c0_i32, %c0_i32_0 : i32, i32
  }
  func.func @transform_3(%arg0: i32, %arg1: memref<16xi32, #tpu.memory_space<smem>>) -> (i32, i32) {
    %c0_i32 = arith.constant 0 : i32
    %c0_i32_0 = arith.constant 0 : i32
    %c0_i32_1 = arith.constant 0 : i32
    return %c0_i32, %c0_i32_0 : i32, i32
  }
  func.func @transform_4(%arg0: i32, %arg1: memref<16xi32, #tpu.memory_space<smem>>) -> (i32, i32) {
    %c0_i32 = arith.constant 0 : i32
    %c0_i32_0 = arith.constant 0 : i32
    return %arg0, %c0_i32 : i32, i32
  }
}

</mosaic_0001>

<llo_original>
// kernel: tpu_custom_call.1
$region0: #{tpu_custom_call.1}
  #allocation0 [shape = 'u32[]', space=smem, size = 0x4, offset = 0x4, fixed_abs, tag = 'smem constant byte address 0x4 - core index']
  #allocation1 [shape = 'u32[144,128]{1,0:T(1,128)}', space=vmem, size = 0x12000, scoped, tag = 'internal scratch']
  #allocation2 [shape = 'f32[16,128]{1,0:T(8,128)}', space=vmem, size = 0x2000, scoped, tag = 'scratch operand']
  #allocation3 [shape = 's32[1]{0}', space=sflag, size = 0x4, scoped, tag = 'scoped memory for tpu_custom_call.1']
  #allocation4 [shape = 'u8[512]{0}', space=smem, size = 0x200, scoped, tag = 'prefetched SMEM operand 0']
  %s0 = inlined_call_operand.hbm [shape: s32[16], index: 0, kind: input, shape index: {}]
  %s1 = inlined_call_operand.hbm [shape: bf16[16,768], index: 1, kind: input, shape index: {}]
  %s2 = inlined_call_operand.hbm [shape: bf16[768,128], index: 2, kind: input, shape index: {}]
  %s3 = inlined_call_operand.vmem [shape: f32[1,128], index: 3, kind: input, shape index: {}]
  %s4 = inlined_call_operand.hbm [shape: f32[577,128], index: 4, kind: input, shape index: {}]
  %s5 = inlined_call_operand.hbm [shape: f32[16,128], index: 5, kind: output, shape index: {}]
  %s6 = sld [smem:[#allocation0]]
  $region45: #{tpu_custom_call.1} parent=0
    _
  %s8 = ssub.s32 1, %s6
  %s9 = scalar_select 0, %s8, %s6
  %11 = dma.hbm_to_smem %s0, 16, [#allocation4], [#allocation3]
  %12 = dma.done [#allocation3], 16
  %13 = sfence
  $region1: #{tpu_custom_call.1} parent=0
    #allocation5 [shape = 'u8[24576]{0}', space=vmem, size = 0x6000, scoped, tag = 'input window, operand 1, single buffered']
    #allocation6 [shape = 's32[1]{0}', space=sflag, size = 0x4, scoped, tag = 'scoped memory for tpu_custom_call.1']
    #allocation7 [shape = 's32[1]{0}', space=sflag, size = 0x4, scoped, tag = 'scoped memory for tpu_custom_call.1']
    #allocation8 [shape = 'u8[196608]{0}', space=vmem, size = 0x30000, scoped, tag = 'input window, operand 2, single buffered']
    #allocation9 [shape = 's32[1]{0}', space=sflag, size = 0x4, scoped, tag = 'scoped memory for tpu_custom_call.1']
    #allocation10 [shape = 'u8[299008]{0}', space=vmem, size = 0x49000, scoped, tag = 'input window, operand 4, single buffered']
    #allocation11 [shape = 'u8[8192]{0}', space=vmem, size = 0x2000, scoped, tag = 'output window, operand 0, single buffered']
    %14 = vsyncpa [#allocation6], 0
    %15 = vsyncpa [#allocation9], 0
    %16 = vsyncpa [#allocation7], 0
    // Predicated region
    $region2: #{tpu_custom_call.1} parent=1 // pred_check
      _
    $region3: #{tpu_custom_call.1} parent=1 // pred_check_branch
      %18 = sbr.rel (0) target = $region5
    $region4: #{tpu_custom_call.1} parent=1 // pred_region
      %s20 = ssub.s32 768, 768
      %21 = vsyncadd [#allocation6], %s20
      %s22 = sshll.u32 [#allocation5], 4
      %s23 = int_to_ptr.vmem [resolvable:$true] %s22
      %28 = dma.hbm_to_vmem [thread:$0]  %s1, 768, %s23, [#allocation6], 384, 384, 24
    $region5: #{tpu_custom_call.1} parent=1 // pred_fallthru
      _
    // Predicated region
    $region6: #{tpu_custom_call.1} parent=1 // pred_check
      _
    $region7: #{tpu_custom_call.1} parent=1 // pred_check_branch
      %30 = sbr.rel (0) target = $region9
    $region8: #{tpu_custom_call.1} parent=1 // pred_region
      %s32 = ssub.s32 6144, 6144
      %33 = vsyncadd [#allocation9], %s32
      %s34 = sshll.u32 [#allocation8], 4
      %s35 = int_to_ptr.vmem [resolvable:$true] %s34
      %40 = dma.hbm_to_vmem [thread:$0]  %s2, 6144, %s35, [#allocation9], 64, 64, 4
    $region9: #{tpu_custom_call.1} parent=1 // pred_fallthru
      _
    // Predicated region
    $region10: #{tpu_custom_call.1} parent=1 // pred_check
      _
    $region11: #{tpu_custom_call.1} parent=1 // pred_check_branch
      %42 = sbr.rel (0) target = $region13
    $region12: #{tpu_custom_call.1} parent=1 // pred_region
      _
    $region13: #{tpu_custom_call.1} parent=1 // pred_fallthru
      _
    // Predicated region
    $region14: #{tpu_custom_call.1} parent=1 // pred_check
      _
    $region15: #{tpu_custom_call.1} parent=1 // pred_check_branch
      %44 = sbr.rel (0) target = $region17
    $region16: #{tpu_custom_call.1} parent=1 // pred_region
      %s46 = ssub.s32 9344, 9344
      %47 = vsyncadd [#allocation9], %s46
      %s48 = sshll.u32 [#allocation10], 4
      %s49 = int_to_ptr.vmem [resolvable:$true] %s48
      %54 = dma.hbm_to_vmem [thread:$0]  %s4, 9344, %s49, [#allocation9], 128, 128, 8
    $region17: #{tpu_custom_call.1} parent=1 // pred_fallthru
      _
    // Predicated region
    $region18: #{tpu_custom_call.1} parent=1 // pred_check
      _
    $region19: #{tpu_custom_call.1} parent=1 // pred_check_branch
      %56 = sbr.rel (0) target = $region21
    $region20: #{tpu_custom_call.1} parent=1 // pred_region
      %57 = dma.done [#allocation6], 768
    $region21: #{tpu_custom_call.1} parent=1 // pred_fallthru
      _
    // Predicated region
    $region22: #{tpu_custom_call.1} parent=1 // pred_check
      _
    $region23: #{tpu_custom_call.1} parent=1 // pred_check_branch
      %59 = sbr.rel (0) target = $region25
    $region24: #{tpu_custom_call.1} parent=1 // pred_region
      %60 = dma.done [#allocation9], 6144
    $region25: #{tpu_custom_call.1} parent=1 // pred_fallthru
      _
    // Predicated region
    $region26: #{tpu_custom_call.1} parent=1 // pred_check
      _
    $region27: #{tpu_custom_call.1} parent=1 // pred_check_branch
      %62 = sbr.rel (0) target = $region29
    $region28: #{tpu_custom_call.1} parent=1 // pred_region
      %63 = dma.done [#allocation9], 9344
    $region29: #{tpu_custom_call.1} parent=1 // pred_fallthru
      _
    %v65 = vld [vmem:[#allocation5] sm:$0xff]
    %v66 = vld [vmem:[#allocation5 + $0x8] sm:$0xff]
    %v67 = vld [vmem:[#allocation5 + $0x10] sm:$0xff]
    %v68 = vld [vmem:[#allocation5 + $0x18] sm:$0xff]
    %v69 = vld [vmem:[#allocation5 + $0x20] sm:$0xff]
    %v70 = vld [vmem:[#allocation5 + $0x28] sm:$0xff]
    %v71 = vld [vmem:[#allocation8] sm:$0xf]
    %v72 = vld [vmem:[#allocation8 + $0x4] sm:$0xf]
    %v73 = vld [vmem:[#allocation8 + $0x8] sm:$0xf]
    %v74 = vld [vmem:[#allocation8 + $0xc] sm:$0xf]
    %v75 = vld [vmem:[#allocation8 + $0x10] sm:$0xf]
    %v76 = vld [vmem:[#allocation8 + $0x14] sm:$0xf]
    %v77 = vld [vmem:[#allocation8 + $0x18] sm:$0xf]
    %v78 = vld [vmem:[#allocation8 + $0x1c] sm:$0xf]
    %v79 = vld [vmem:[#allocation8 + $0x20] sm:$0xf]
    %v80 = vld [vmem:[#allocation8 + $0x24] sm:$0xf]
    %v81 = vld [vmem:[#allocation8 + $0x28] sm:$0xf]
    %v82 = vld [vmem:[#allocation8 + $0x2c] sm:$0xf]
    %v83 = vld [vmem:[#allocation8 + $0x30] sm:$0xf]
    %v84 = vld [vmem:[#allocation8 + $0x34] sm:$0xf]
    %v85 = vld [vmem:[#allocation8 + $0x38] sm:$0xf]
    %v86 = vld [vmem:[#allocation8 + $0x3c] sm:$0xf]
    %v87 = vld [vmem:[#allocation8 + $0x40] sm:$0xf]
    %v88 = vld [vmem:[#allocation8 + $0x44] sm:$0xf]
    %v89 = vld [vmem:[#allocation8 + $0x48] sm:$0xf]
    %v90 = vld [vmem:[#allocation8 + $0x4c] sm:$0xf]
    %v91 = vld [vmem:[#allocation8 + $0x50] sm:$0xf]
    %v92 = vld [vmem:[#allocation8 + $0x54] sm:$0xf]
    %v93 = vld [vmem:[#allocation8 + $0x58] sm:$0xf]
    %v94 = vld [vmem:[#allocation8 + $0x5c] sm:$0xf]
    %v95 = vld [vmem:[#allocation8 + $0x60] sm:$0xf]
    %v96 = vld [vmem:[#allocation8 + $0x64] sm:$0xf]
    %v97 = vld [vmem:[#allocation8 + $0x68] sm:$0xf]
    %v98 = vld [vmem:[#allocation8 + $0x6c] sm:$0xf]
    %v99 = vld [vmem:[#allocation8 + $0x70] sm:$0xf]
    %v100 = vld [vmem:[#allocation8 + $0x74] sm:$0xf]
    %v101 = vld [vmem:[#allocation8 + $0x78] sm:$0xf]
    %v102 = vld [vmem:[#allocation8 + $0x7c] sm:$0xf]
    %v103 = vld [vmem:[#allocation8 + $0x80] sm:$0xf]
    %v104 = vld [vmem:[#allocation8 + $0x84] sm:$0xf]
    %v105 = vld [vmem:[#allocation8 + $0x88] sm:$0xf]
    %v106 = vld [vmem:[#allocation8 + $0x8c] sm:$0xf]
    %v107 = vld [vmem:[#allocation8 + $0x90] sm:$0xf]
    %v108 = vld [vmem:[#allocation8 + $0x94] sm:$0xf]
    %v109 = vld [vmem:[#allocation8 + $0x98] sm:$0xf]
    %v110 = vld [vmem:[#allocation8 + $0x9c] sm:$0xf]
    %v111 = vld [vmem:[#allocation8 + $0xa0] sm:$0xf]
    %v112 = vld [vmem:[#allocation8 + $0xa4] sm:$0xf]
    %v113 = vld [vmem:[#allocation8 + $0xa8] sm:$0xf]
    %v114 = vld [vmem:[#allocation8 + $0xac] sm:$0xf]
    %v115 = vld [vmem:[#allocation8 + $0xb0] sm:$0xf]
    %v116 = vld [vmem:[#allocation8 + $0xb4] sm:$0xf]
    %v117 = vld [vmem:[#allocation8 + $0xb8] sm:$0xf]
    %v118 = vld [vmem:[#allocation8 + $0xbc] sm:$0xf]
    %v119 = vld [vmem:[#allocation8 + $0xc0] sm:$0xf]
    %v120 = vld [vmem:[#allocation8 + $0xc4] sm:$0xf]
    %v121 = vld [vmem:[#allocation8 + $0xc8] sm:$0xf]
    %v122 = vld [vmem:[#allocation8 + $0xcc] sm:$0xf]
    %v123 = vld [vmem:[#allocation8 + $0xd0] sm:$0xf]
    %v124 = vld [vmem:[#allocation8 + $0xd4] sm:$0xf]
    %v125 = vld [vmem:[#allocation8 + $0xd8] sm:$0xf]
    %v126 = vld [vmem:[#allocation8 + $0xdc] sm:$0xf]
    %v127 = vld [vmem:[#allocation8 + $0xe0] sm:$0xf]
    %v128 = vld [vmem:[#allocation8 + $0xe4] sm:$0xf]
    %v129 = vld [vmem:[#allocation8 + $0xe8] sm:$0xf]
    %v130 = vld [vmem:[#allocation8 + $0xec] sm:$0xf]
    %v131 = vld [vmem:[#allocation8 + $0xf0] sm:$0xf]
    %v132 = vld [vmem:[#allocation8 + $0xf4] sm:$0xf]
    %v133 = vld [vmem:[#allocation8 + $0xf8] sm:$0xf]
    %v134 = vld [vmem:[#allocation8 + $0xfc] sm:$0xf]
    %v135 = vld [vmem:[#allocation8 + $0x100] sm:$0xf]
    %v136 = vld [vmem:[#allocation8 + $0x104] sm:$0xf]
    %v137 = vld [vmem:[#allocation8 + $0x108] sm:$0xf]
    %v138 = vld [vmem:[#allocation8 + $0x10c] sm:$0xf]
    %v139 = vld [vmem:[#allocation8 + $0x110] sm:$0xf]
    %v140 = vld [vmem:[#allocation8 + $0x114] sm:$0xf]
    %v141 = vld [vmem:[#allocation8 + $0x118] sm:$0xf]
    %v142 = vld [vmem:[#allocation8 + $0x11c] sm:$0xf]
    %v143 = vld [vmem:[#allocation8 + $0x120] sm:$0xf]
    %v144 = vld [vmem:[#allocation8 + $0x124] sm:$0xf]
    %v145 = vld [vmem:[#allocation8 + $0x128] sm:$0xf]
    %v146 = vld [vmem:[#allocation8 + $0x12c] sm:$0xf]
    %v147 = vld [vmem:[#allocation8 + $0x130] sm:$0xf]
    %v148 = vld [vmem:[#allocation8 + $0x134] sm:$0xf]
    %v149 = vld [vmem:[#allocation8 + $0x138] sm:$0xf]
    %v150 = vld [vmem:[#allocation8 + $0x13c] sm:$0xf]
    %v151 = vld [vmem:[#allocation8 + $0x140] sm:$0xf]
    %v152 = vld [vmem:[#allocation8 + $0x144] sm:$0xf]
    %v153 = vld [vmem:[#allocation8 + $0x148] sm:$0xf]
    %v154 = vld [vmem:[#allocation8 + $0x14c] sm:$0xf]
    %v155 = vld [vmem:[#allocation8 + $0x150] sm:$0xf]
    %v156 = vld [vmem:[#allocation8 + $0x154] sm:$0xf]
    %v157 = vld [vmem:[#allocation8 + $0x158] sm:$0xf]
    %v158 = vld [vmem:[#allocation8 + $0x15c] sm:$0xf]
    %v159 = vld [vmem:[#allocation8 + $0x160] sm:$0xf]
    %v160 = vld [vmem:[#allocation8 + $0x164] sm:$0xf]
    %v161 = vld [vmem:[#allocation8 + $0x168] sm:$0xf]
    %v162 = vld [vmem:[#allocation8 + $0x16c] sm:$0xf]
    %v163 = vld [vmem:[#allocation8 + $0x170] sm:$0xf]
    %v164 = vld [vmem:[#allocation8 + $0x174] sm:$0xf]
    %v165 = vld [vmem:[#allocation8 + $0x178] sm:$0xf]
    %v166 = vld [vmem:[#allocation8 + $0x17c] sm:$0xf]
    %s167 = smul.u32 0, 16
    loop: start=0, step=1, limit=16
    $region30: #{tpu_custom_call.1} parent=1 // loop_pre_header
      _
    $region31: #{tpu_custom_call.1} parent=1 // loop_header
      %s169 = sphi 0, %s173
      %p170 = scmp.ge.s32.totalorder %s169, 16
    $region32: #{tpu_custom_call.1} parent=1 // loop_header_branch
      %172 = sbr.rel (%p170) target = $region36
    $region33: #{tpu_custom_call.1} parent=1 // loop_body
      %s174 = sadd.s32 %s167, %s169
      %s175 = sld [smem:[#allocation4 + %s174]]
      %s176 = scalar_lea.vmem [#allocation10], %s175
      %v177 = vld [vmem:[%s176] sm:$0x1]
      %s178 = scalar_lea.vmem [#allocation2], %s169
      %179 = vst [vmem:[%s178] sm:$0x1] %v177
    $region34: #{tpu_custom_call.1} parent=1 // loop_footer
      %s173 = sadd.s32 1, %s169
    $region35: #{tpu_custom_call.1} parent=1 // loop_footer_branch
      %168 = sbr.rel target = $region31
    $region36: #{tpu_custom_call.1} parent=1 // loop_exit
      _
    %v180 = vld [vmem:[%s3] sm:$0x1]
    %v182 = vlaneseq
    %v183 = vshrl.u32 %v182, 7
    %v184 = vsub.s32 0, %v183
    %v185 = vrot.slane %v180, %v184
    %v193 = vunpack.c.l.b16 %v65
    %v194 = vunpack.c.h.b16 %v65
    %v195 = vunpack.c.l.b16 %v66
    %v196 = vunpack.c.h.b16 %v66
    %v197 = vunpack.c.l.b16 %v67
    %v198 = vunpack.c.h.b16 %v67
    %v199 = vunpack.c.l.b16 %v68
    %v200 = vunpack.c.h.b16 %v68
    %v201 = vunpack.c.l.b16 %v69
    %v202 = vunpack.c.h.b16 %v69
    %v203 = vunpack.c.l.b16 %v70
    %v204 = vunpack.c.h.b16 %v70
    %v205 = vpack.c.b16 %v199, %v193
    %v206 = vpack.c.b16 %v200, %v194
    %v207 = vpack.c.b16 %v201, %v195
    %v208 = vpack.c.b16 %v202, %v196
    %v209 = vpack.c.b16 %v203, %v197
    %v210 = vpack.c.b16 %v204, %v198
    %v313 = vunpack.c.l.b16 %v71
    %v314 = vunpack.c.l.b16 %v72
    %v315 = vunpack.c.l.b16 %v73
    %v316 = vunpack.c.l.b16 %v74
    %v317 = vunpack.c.l.b16 %v75
    %v318 = vunpack.c.l.b16 %v76
    %v319 = vunpack.c.l.b16 %v77
    %v320 = vunpack.c.l.b16 %v78
    %v321 = vunpack.c.l.b16 %v79
    %v322 = vunpack.c.l.b16 %v80
    %v323 = vunpack.c.l.b16 %v81
    %v324 = vunpack.c.l.b16 %v82
    %v325 = vunpack.c.l.b16 %v83
    %v326 = vunpack.c.l.b16 %v84
    %v327 = vunpack.c.l.b16 %v85
    %v328 = vunpack.c.l.b16 %v86
    %v329 = vunpack.c.l.b16 %v87
    %v330 = vunpack.c.l.b16 %v88
    %v331 = vunpack.c.l.b16 %v89
    %v332 = vunpack.c.l.b16 %v90
    %v333 = vunpack.c.l.b16 %v91
    %v334 = vunpack.c.l.b16 %v92
    %v335 = vunpack.c.l.b16 %v93
    %v336 = vunpack.c.l.b16 %v94
    %v337 = vunpack.c.l.b16 %v95
    %v338 = vunpack.c.l.b16 %v96
    %v339 = vunpack.c.l.b16 %v97
    %v340 = vunpack.c.l.b16 %v98
    %v341 = vunpack.c.l.b16 %v99
    %v342 = vunpack.c.l.b16 %v100
    %v343 = vunpack.c.l.b16 %v101
    %v344 = vunpack.c.l.b16 %v102
    %v345 = vunpack.c.l.b16 %v103
    %v346 = vunpack.c.l.b16 %v104
    %v347 = vunpack.c.l.b16 %v105
    %v348 = vunpack.c.l.b16 %v106
    %v349 = vunpack.c.l.b16 %v107
    %v350 = vunpack.c.l.b16 %v108
    %v351 = vunpack.c.l.b16 %v109
    %v352 = vunpack.c.l.b16 %v110
    %v353 = vunpack.c.l.b16 %v111
    %v354 = vunpack.c.l.b16 %v112
    %v355 = vunpack.c.l.b16 %v113
    %v356 = vunpack.c.l.b16 %v114
    %v357 = vunpack.c.l.b16 %v115
    %v358 = vunpack.c.l.b16 %v116
    %v359 = vunpack.c.l.b16 %v117
    %v360 = vunpack.c.l.b16 %v118
    %v361 = vunpack.c.l.b16 %v119
    %v362 = vunpack.c.l.b16 %v120
    %v363 = vunpack.c.l.b16 %v121
    %v364 = vunpack.c.l.b16 %v122
    %v365 = vunpack.c.l.b16 %v123
    %v366 = vunpack.c.l.b16 %v124
    %v367 = vunpack.c.l.b16 %v125
    %v368 = vunpack.c.l.b16 %v126
    %v369 = vunpack.c.l.b16 %v127
    %v370 = vunpack.c.l.b16 %v128
    %v371 = vunpack.c.l.b16 %v129
    %v372 = vunpack.c.l.b16 %v130
    %v373 = vunpack.c.l.b16 %v131
    %v374 = vunpack.c.l.b16 %v132
    %v375 = vunpack.c.l.b16 %v133
    %v376 = vunpack.c.l.b16 %v134
    %v377 = vunpack.c.l.b16 %v135
    %v378 = vunpack.c.l.b16 %v136
    %v379 = vunpack.c.l.b16 %v137
    %v380 = vunpack.c.l.b16 %v138
    %v381 = vunpack.c.l.b16 %v139
    %v382 = vunpack.c.l.b16 %v140
    %v383 = vunpack.c.l.b16 %v141
    %v384 = vunpack.c.l.b16 %v142
    %v385 = vunpack.c.l.b16 %v143
    %v386 = vunpack.c.l.b16 %v144
    %v387 = vunpack.c.l.b16 %v145
    %v388 = vunpack.c.l.b16 %v146
    %v389 = vunpack.c.l.b16 %v147
    %v390 = vunpack.c.l.b16 %v148
    %v391 = vunpack.c.l.b16 %v149
    %v392 = vunpack.c.l.b16 %v150
    %v393 = vunpack.c.l.b16 %v151
    %v394 = vunpack.c.l.b16 %v152
    %v395 = vunpack.c.l.b16 %v153
    %v396 = vunpack.c.l.b16 %v154
    %v397 = vunpack.c.l.b16 %v155
    %v398 = vunpack.c.l.b16 %v156
    %v399 = vunpack.c.l.b16 %v157
    %v400 = vunpack.c.l.b16 %v158
    %v401 = vunpack.c.l.b16 %v159
    %v402 = vunpack.c.l.b16 %v160
    %v403 = vunpack.c.l.b16 %v161
    %v404 = vunpack.c.l.b16 %v162
    %v405 = vunpack.c.l.b16 %v163
    %v406 = vunpack.c.l.b16 %v164
    %v407 = vunpack.c.l.b16 %v165
    %v408 = vunpack.c.l.b16 %v166
    %v409 = vpack.c.b16 %v314, %v313
    %v410 = vpack.c.b16 %v316, %v315
    %v411 = vpack.c.b16 %v318, %v317
    %v412 = vpack.c.b16 %v320, %v319
    %v413 = vpack.c.b16 %v322, %v321
    %v414 = vpack.c.b16 %v324, %v323
    %v415 = vpack.c.b16 %v326, %v325
    %v416 = vpack.c.b16 %v328, %v327
    %v417 = vpack.c.b16 %v330, %v329
    %v418 = vpack.c.b16 %v332, %v331
    %v419 = vpack.c.b16 %v334, %v333
    %v420 = vpack.c.b16 %v336, %v335
    %v421 = vpack.c.b16 %v338, %v337
    %v422 = vpack.c.b16 %v340, %v339
    %v423 = vpack.c.b16 %v342, %v341
    %v424 = vpack.c.b16 %v344, %v343
    %v425 = vpack.c.b16 %v346, %v345
    %v426 = vpack.c.b16 %v348, %v347
    %v427 = vpack.c.b16 %v350, %v349
    %v428 = vpack.c.b16 %v352, %v351
    %v429 = vpack.c.b16 %v354, %v353
    %v430 = vpack.c.b16 %v356, %v355
    %v431 = vpack.c.b16 %v358, %v357
    %v432 = vpack.c.b16 %v360, %v359
    %v433 = vpack.c.b16 %v362, %v361
    %v434 = vpack.c.b16 %v364, %v363
    %v435 = vpack.c.b16 %v366, %v365
    %v436 = vpack.c.b16 %v368, %v367
    %v437 = vpack.c.b16 %v370, %v369
    %v438 = vpack.c.b16 %v372, %v371
    %v439 = vpack.c.b16 %v374, %v373
    %v440 = vpack.c.b16 %v376, %v375
    %v441 = vpack.c.b16 %v378, %v377
    %v442 = vpack.c.b16 %v380, %v379
    %v443 = vpack.c.b16 %v382, %v381
    %v444 = vpack.c.b16 %v384, %v383
    %v445 = vpack.c.b16 %v386, %v385
    %v446 = vpack.c.b16 %v388, %v387
    %v447 = vpack.c.b16 %v390, %v389
    %v448 = vpack.c.b16 %v392, %v391
    %v449 = vpack.c.b16 %v394, %v393
    %v450 = vpack.c.b16 %v396, %v395
    %v451 = vpack.c.b16 %v398, %v397
    %v452 = vpack.c.b16 %v400, %v399
    %v453 = vpack.c.b16 %v402, %v401
    %v454 = vpack.c.b16 %v404, %v403
    %v455 = vpack.c.b16 %v406, %v405
    %v456 = vpack.c.b16 %v408, %v407
    %505 = vmatprep.subr.bf16.mxu0 0
    %506 = vmatpush1.bf16.msra.mxu0 %v416
    %507 = vmatprep.subr.bf16.mxu0 0
    %508 = vmatpush1.bf16.msra.mxu0 %v415
    %509 = vmatprep.subr.bf16.mxu0 0
    %510 = vmatpush1.bf16.msra.mxu0 %v414
    %511 = vmatprep.subr.bf16.mxu0 0
    %512 = vmatpush1.bf16.msra.mxu0 %v413
    %513 = vmatprep.subr.bf16.mxu0 0
    %514 = vmatpush1.bf16.msra.mxu0 %v412
    %515 = vmatprep.subr.bf16.mxu0 0
    %516 = vmatpush1.bf16.msra.mxu0 %v411
    %517 = vmatprep.subr.bf16.mxu0 0
    %518 = vmatpush1.bf16.msra.mxu0 %v410
    %519 = vmatprep.subr.bf16.mxu0 0
    %520 = vmatpush1.bf16.msra.mxu0 %v409
    %521 = vmatprep.subr.bf16.mxu0 0
    %522 = vmatpush2.bf16.msra.mxu0 %v424
    %523 = vmatprep.subr.bf16.mxu0 0
    %524 = vmatpush2.bf16.msra.mxu0 %v423
    %525 = vmatprep.subr.bf16.mxu0 0
    %526 = vmatpush2.bf16.msra.mxu0 %v422
    %527 = vmatprep.subr.bf16.mxu0 0
    %528 = vmatpush2.bf16.msra.mxu0 %v421
    %529 = vmatprep.subr.bf16.mxu0 0
    %530 = vmatpush2.bf16.msra.mxu0 %v420
    %531 = vmatprep.subr.bf16.mxu0 0
    %532 = vmatpush2.bf16.msra.mxu0 %v419
    %533 = vmatprep.subr.bf16.mxu0 0
    %534 = vmatpush2.bf16.msra.mxu0 %v418
    %535 = vmatprep.subr.bf16.mxu0 0
    %536 = vmatpush2.bf16.msra.mxu0 %v417
    %537 = vmatprep.mubr.bf16.mxu0 %v206
    %538 = vmatmul.mubr.bf16.gmra.mxu0 %v205
    %v539 = vpop.f32.mrf.mxu0
    %v540 = vadd.f32 %v185, %v539
    %v541 = vpop.f32.mrf.mxu0
    %v542 = vpop.f32.mrf.mxu0
    %v543 = vadd.f32 %v185, %v542
    %v544 = vpop.f32.mrf.mxu0
    %545 = vdwg.mxu0
    %546 = vmatprep.subr.bf16.mxu0 0
    %547 = vmatpush1.bf16.msra.mxu0 %v432
    %548 = vmatprep.subr.bf16.mxu0 0
    %549 = vmatpush1.bf16.msra.mxu0 %v431
    %550 = vmatprep.subr.bf16.mxu0 0
    %551 = vmatpush1.bf16.msra.mxu0 %v430
    %552 = vmatprep.subr.bf16.mxu0 0
    %553 = vmatpush1.bf16.msra.mxu0 %v429
    %554 = vmatprep.subr.bf16.mxu0 0
    %555 = vmatpush1.bf16.msra.mxu0 %v428
    %556 = vmatprep.subr.bf16.mxu0 0
    %557 = vmatpush1.bf16.msra.mxu0 %v427
    %558 = vmatprep.subr.bf16.mxu0 0
    %559 = vmatpush1.bf16.msra.mxu0 %v426
    %560 = vmatprep.subr.bf16.mxu0 0
    %561 = vmatpush1.bf16.msra.mxu0 %v425
    %562 = vmatprep.subr.bf16.mxu0 0
    %563 = vmatpush2.bf16.msra.mxu0 %v440
    %564 = vmatprep.subr.bf16.mxu0 0
    %565 = vmatpush2.bf16.msra.mxu0 %v439
    %566 = vmatprep.subr.bf16.mxu0 0
    %567 = vmatpush2.bf16.msra.mxu0 %v438
    %568 = vmatprep.subr.bf16.mxu0 0
    %569 = vmatpush2.bf16.msra.mxu0 %v437
    %570 = vmatprep.subr.bf16.mxu0 0
    %571 = vmatpush2.bf16.msra.mxu0 %v436
    %572 = vmatprep.subr.bf16.mxu0 0
    %573 = vmatpush2.bf16.msra.mxu0 %v435
    %574 = vmatprep.subr.bf16.mxu0 0
    %575 = vmatpush2.bf16.msra.mxu0 %v434
    %576 = vmatprep.subr.bf16.mxu0 0
    %577 = vmatpush2.bf16.msra.mxu0 %v433
    %578 = vmatprep.mubr.bf16.mxu0 %v208
    %579 = vmatmul.mubr.bf16.gmra.mxu0 %v207
    %v580 = vpop.f32.mrf.mxu0
    %v581 = vadd.f32 %v540, %v580
    %v582 = vpop.f32.mrf.mxu0
    %v583 = vpop.f32.mrf.mxu0
    %v584 = vadd.f32 %v543, %v583
    %v585 = vpop.f32.mrf.mxu0
    %586 = vdwg.mxu0
    %587 = vmatprep.subr.bf16.mxu0 0
    %588 = vmatpush1.bf16.msra.mxu0 %v448
    %589 = vmatprep.subr.bf16.mxu0 0
    %590 = vmatpush1.bf16.msra.mxu0 %v447
    %591 = vmatprep.subr.bf16.mxu0 0
    %592 = vmatpush1.bf16.msra.mxu0 %v446
    %593 = vmatprep.subr.bf16.mxu0 0
    %594 = vmatpush1.bf16.msra.mxu0 %v445
    %595 = vmatprep.subr.bf16.mxu0 0
    %596 = vmatpush1.bf16.msra.mxu0 %v444
    %597 = vmatprep.subr.bf16.mxu0 0
    %598 = vmatpush1.bf16.msra.mxu0 %v443
    %599 = vmatprep.subr.bf16.mxu0 0
    %600 = vmatpush1.bf16.msra.mxu0 %v442
    %601 = vmatprep.subr.bf16.mxu0 0
    %602 = vmatpush1.bf16.msra.mxu0 %v441
    %603 = vmatprep.subr.bf16.mxu0 0
    %604 = vmatpush2.bf16.msra.mxu0 %v456
    %605 = vmatprep.subr.bf16.mxu0 0
    %606 = vmatpush2.bf16.msra.mxu0 %v455
    %607 = vmatprep.subr.bf16.mxu0 0
    %608 = vmatpush2.bf16.msra.mxu0 %v454
    %609 = vmatprep.subr.bf16.mxu0 0
    %610 = vmatpush2.bf16.msra.mxu0 %v453
    %611 = vmatprep.subr.bf16.mxu0 0
    %612 = vmatpush2.bf16.msra.mxu0 %v452
    %613 = vmatprep.subr.bf16.mxu0 0
    %614 = vmatpush2.bf16.msra.mxu0 %v451
    %615 = vmatprep.subr.bf16.mxu0 0
    %616 = vmatpush2.bf16.msra.mxu0 %v450
    %617 = vmatprep.subr.bf16.mxu0 0
    %618 = vmatpush2.bf16.msra.mxu0 %v449
    %619 = vmatprep.mubr.bf16.mxu0 %v210
    %620 = vmatmul.mubr.bf16.gmra.mxu0 %v209
    %v621 = vpop.f32.mrf.mxu0
    %v622 = vadd.f32 %v581, %v621
    %v623 = vpop.f32.mrf.mxu0
    %v624 = vpop.f32.mrf.mxu0
    %v625 = vadd.f32 %v584, %v624
    %v626 = vpop.f32.mrf.mxu0
    %627 = vdwg.mxu0
    %v628 = vld [vmem:[#allocation2] sm:$0xff]
    %v629 = vld [vmem:[#allocation2 + $0x8] sm:$0xff]
    %v630 = vadd.f32 %v622, %v628
    %v631 = vadd.f32 %v625, %v629
    %632 = vst [vmem:[#allocation11] sm:$0xff] %v630
    %633 = vst [vmem:[#allocation11 + $0x8] sm:$0xff] %v631
    // Predicated region
    $region37: #{tpu_custom_call.1} parent=1 // pred_check
      _
    $region38: #{tpu_custom_call.1} parent=1 // pred_check_branch
      %635 = sbr.rel (0) target = $region40
    $region39: #{tpu_custom_call.1} parent=1 // pred_region
      %s637 = ssub.s32 256, 256
      %638 = vsyncadd [#allocation7], %s637
      %s639 = sshll.u32 [#allocation11], 4
      %s640 = int_to_ptr.vmem [resolvable:$true] %s639
      %645 = dma.vmem_to_hbm [thread:$0]  %s640, 256, %s5, [#allocation7], 128, 128, 8
    $region40: #{tpu_custom_call.1} parent=1 // pred_fallthru
      _
    // Predicated region
    $region41: #{tpu_custom_call.1} parent=1 // pred_check
      _
    $region42: #{tpu_custom_call.1} parent=1 // pred_check_branch
      %647 = sbr.rel (0) target = $region44
    $region43: #{tpu_custom_call.1} parent=1 // pred_region
      %648 = dma.done [#allocation7], 256
    $region44: #{tpu_custom_call.1} parent=1 // pred_fallthru
      _
    %649 = vsyncpa [#allocation6], 1
    %650 = vsyncpa [#allocation9], 1
    %651 = vsyncpa [#allocation7], 1

</llo_original>
